<compile_context>
chip_gen: v6e
topology: v6e:2x2x1
jax: 0.10.0
libtpu: 0.0.40
codegen_flags: <defaults>
</compile_context>

<pallas_src>
import numpy as np
import jax
import jax.numpy as jnp
from jax.experimental import pallas as pl
from jax.experimental.pallas import tpu as pltpu


def _round_up(x, m):
    return ((x + m - 1) // m) * m


def _cdiv(a, b):
    return -(-a // b)


# ---------------------------------------------------------------------------
# Kernel: one GRU step (gate order r|z|n) for a tile of rows.
# ---------------------------------------------------------------------------
def gru_update_kernel(m_ref, h_ref, wih_t_ref, whh_t_ref, bx_ref, bhn_ref, out_ref):
    """
    m_ref:     (TM, K)      bf16   aggregated messages
    h_ref:     (TM, H)      bf16   previous hidden state
    wih_t_ref: (K, 3*Hg)    bf16   gate-major [r|z|n] input weights (transposed)
    whh_t_ref: (H, 3*Hg)    bf16   gate-major [r|z|n] hidden weights (transposed)
    bx_ref:    (1, 3*Hg)    f32    combined bias [b_ir+b_hr | b_iz+b_hz | b_in]
    bhn_ref:   (1, H)       f32    hidden bias of the n gate (stays inside r*(.))
    out_ref:   (TM, H)      bf16   new hidden state
    """
    H = out_ref.shape[1]
    Hg = wih_t_ref.shape[1] // 3

    # MXU matmuls: bf16 inputs, f32 accumulation; single bias add on gx.
    gx = jnp.dot(m_ref[...], wih_t_ref[...],
                 preferred_element_type=jnp.float32) + bx_ref[...]
    gh = jnp.dot(h_ref[...], whh_t_ref[...],
                 preferred_element_type=jnp.float32)

    # Both sigmoids in a single EUP pass over the packed [r|z] columns.
    rz = jax.nn.sigmoid(gx[:, :2 * Hg] + gh[:, :2 * Hg])
    r = rz[:, 0:H]
    z = rz[:, Hg:Hg + H]
    n = jnp.tanh(gx[:, 2 * Hg:2 * Hg + H]
                 + r * (gh[:, 2 * Hg:2 * Hg + H] + bhn_ref[...]))

    h = h_ref[...].astype(jnp.float32)
    # (1 - z) * n + z * h == n + z * (h - n)   (one fewer VPU multiply)
    out_ref[...] = (n + z * (h - n)).astype(out_ref.dtype)


# ---------------------------------------------------------------------------
# One-time weight preparation (do at weight-load time, not per forward call).
# ---------------------------------------------------------------------------
def prepare_gru_params(w_ih, w_hh, b_ih, b_hh):
    """PyTorch nn.GRU layout in: w_ih (3H, IN_M), w_hh (3H, H), b_ih/b_hh (3H,).

    Out: gate-major bf16 W^T matrices + pre-combined f32 biases.
      * H <= 128 -> packed layout, gate stride Hg = H (3H contiguous columns).
      * H  > 128 -> per-gate 128-lane alignment, Hg = round_up(H, 128).
    The contraction (K) dimension is NOT padded (MXU does not require K%128==0).
    """
    three_h = w_ih.shape[0]
    H = three_h // 3
    in_m = w_ih.shape[1]
    Hg = H if H <= 128 else _round_up(H, 128)

    def gate_major_t(w, k):
        w = w.astype(jnp.float32)
        if Hg == H:
            return jnp.transpose(w).astype(jnp.bfloat16)           # (k, 3H)
        out = jnp.zeros((k, 3 * Hg), jnp.float32)
        for g in range(3):
            out = out.at[:, g * Hg:g * Hg + H].set(
                jnp.transpose(w[g * H:(g + 1) * H, :]))
        return out.astype(jnp.bfloat16)

    wih_t = gate_major_t(w_ih, in_m)    # (IN_M, 3*Hg)
    whh_t = gate_major_t(w_hh, H)       # (H,    3*Hg)

    b_ih = b_ih.astype(jnp.float32)
    b_hh = b_hh.astype(jnp.float32)
    gate_biases = [b_ih[0:H] + b_hh[0:H],              # r: b_ir + b_hr
                   b_ih[H:2 * H] + b_hh[H:2 * H],      # z: b_iz + b_hz
                   b_ih[2 * H:3 * H]]                  # n: b_in only
    if Hg == H:
        bx = jnp.concatenate(gate_biases).reshape(1, 3 * H)
    else:
        bx = jnp.zeros((3 * Hg,), jnp.float32)
        for g in range(3):
            bx = bx.at[g * Hg:g * Hg + H].set(gate_biases[g])
        bx = bx.reshape(1, 3 * Hg)
    bhn = b_hh[2 * H:3 * H].reshape(1, H)               # b_hn stays inside r*(.)
    return wih_t, whh_t, bx, bhn


# ---------------------------------------------------------------------------
# Wrapper
# ---------------------------------------------------------------------------
def _vmem_limit_bytes():
    # Generation-aware VMEM request with ~25% headroom
    # (v5e/v6e: 128 MiB -> 96 MiB; v7x: 64 MiB -> 48 MiB).
    try:
        cap = pltpu.get_tpu_info().vmem_capacity_bytes
    except Exception:
        cap = 64 * 1024 * 1024
    return min(int(cap) * 3 // 4, 96 * 1024 * 1024)


def _pick_tile_m(M, K, H, Hg, out_bytes, vmem_limit):
    if M <= 512:
        # No row padding needed: either one full-extent block, or an exact halving
        # (rows % 8 == 0) so the 'parallel' row axis can shard across v7x's 2 TCs.
        if M >= 32 and M % 16 == 0:
            return M // 2
        return M
    # Resident (single-buffered) weights + biases.
    weight_bytes = (K + H) * 3 * Hg * 2 + (3 * Hg + H) * 4
    # Per-row VMEM: double-buffered bf16 in/out tiles + ~3 f32 (3*Hg) gate intermediates.
    per_row = 2 * 2 * (K + H) + 2 * out_bytes * H + 3 * 4 * 3 * Hg
    budget = vmem_limit - weight_bytes - (4 << 20)
    tm = max(64, min(512, budget // max(per_row, 1)))
    tm = (tm // 16) * 16
    steps = _cdiv(M, tm)
    return _round_up(_cdiv(M, steps), 16)   # even split across steps, 16-row aligned


def mpnn_update(h_v, m_v, params, *, out_dtype=jnp.bfloat16, tile_m=None):
    """UpdateFunction('mpnn').forward(h_v, m_v) — Pallas TPU kernel wrapper.

    h_v: (B, N, H) node hidden states, m_v: (B, N, IN_M) aggregated messages,
    params: output of prepare_gru_params (call once at weight-load time).
    """
    wih_t, whh_t, bx, bhn = params
    B, N, H = h_v.shape
    IN_M = m_v.shape[2]
    M = B * N
    K, three_hg = wih_t.shape
    Hg = three_hg // 3
    assert K == IN_M and whh_t.shape[0] == H

    out_bytes = np.dtype(out_dtype).itemsize
    vmem_limit = _vmem_limit_bytes()
    if tile_m is None:
        tile_m = _pick_tile_m(M, K, H, Hg, out_bytes, vmem_limit)
    steps = _cdiv(M, tile_m)
    Mp = steps * tile_m

    # Feed activations directly: reshape is free, the bf16 cast is the only pass
    # and is required for MXU inputs anyway.  Rows padded only if M % tile_m != 0.
    m2 = m_v.reshape(M, IN_M).astype(jnp.bfloat16)
    h2 = h_v.reshape(M, H).astype(jnp.bfloat16)
    if Mp != M:
        m2 = jnp.pad(m2, ((0, Mp - M), (0, 0)))
        h2 = jnp.pad(h2, ((0, Mp - M), (0, 0)))

    cost = pl.CostEstimate(
        flops=2 * Mp * (K + H) * 3 * Hg,
        transcendentals=Mp * (2 * Hg + H),
        bytes_accessed=(Mp * K + Mp * H) * 2            # bf16 activations in
                       + (K + H) * 3 * Hg * 2           # bf16 weights
                       + (3 * Hg + H) * 4               # f32 biases
                       + Mp * H * out_bytes,            # output
    )

    def build(single_buffer_weights):
        # Grid-invariant operands (constant index map) are single-buffered:
        # default double-buffering would duplicate the resident weights in VMEM
        # with zero pipelining benefit.
        const_kw = {"pipeline_mode": pl.Buffered(1)} if single_buffer_weights else {}
        grid_spec = pltpu.PrefetchScalarGridSpec(
            num_scalar_prefetch=0,
            grid=(steps,),
            in_specs=[
                pl.BlockSpec((tile_m, K), lambda i: (i, 0)),               # m rows tile
                pl.BlockSpec((tile_m, H), lambda i: (i, 0)),               # h rows tile
                pl.BlockSpec((K, 3 * Hg), lambda i: (0, 0), **const_kw),   # W_ih^T (resident)
                pl.BlockSpec((H, 3 * Hg), lambda i: (0, 0), **const_kw),   # W_hh^T (resident)
                pl.BlockSpec((1, 3 * Hg), lambda i: (0, 0), **const_kw),   # combined bias
                pl.BlockSpec((1, H), lambda i: (0, 0), **const_kw),        # b_hn
            ],
            out_specs=pl.BlockSpec((tile_m, H), lambda i: (i, 0)),
        )
        return pl.pallas_call(
            gru_update_kernel,
            out_shape=jax.ShapeDtypeStruct((Mp, H), out_dtype),
            grid_spec=grid_spec,
            compiler_params=pltpu.CompilerParams(
                dimension_semantics=("parallel",),
                vmem_limit_bytes=vmem_limit),
            cost_estimate=cost,
        )

    try:
        out = build(True)(m2, h2, wih_t, whh_t, bx, bhn)
    except Exception:
        # Fallback for jax versions without BlockSpec.pipeline_mode support.
        out = build(False)(m2, h2, wih_t, whh_t, bx, bhn)

    if Mp != M:
        out = out[:M]
    return out.reshape(B, N, H)


# ---------------------------------------------------------------------------
# Pure-JAX f32 reference (mirrors torch.nn.GRU single step, gate order r|z|n).
# ---------------------------------------------------------------------------
def mpnn_update_ref(h_v, m_v, w_ih, w_hh, b_ih, b_hh):
    B, N, H = h_v.shape
    x = m_v.reshape(-1, m_v.shape[2]).astype(jnp.float32)
    h = h_v.reshape(-1, H).astype(jnp.float32)
    gx = x @ w_ih.T + b_ih
    gh = h @ w_hh.T + b_hh
    r = jax.nn.sigmoid(gx[:, :H] + gh[:, :H])
    z = jax.nn.sigmoid(gx[:, H:2 * H] + gh[:, H:2 * H])
    n = jnp.tanh(gx[:, 2 * H:] + r * gh[:, 2 * H:])
    return ((1.0 - z) * n + z * h).reshape(B, N, H)


if __name__ == "__main__":
    # Small shapes consistent with u_mpnn: batch=2, nodes=8, in_m=32, out(hidden)=32.
    B, N, IN_M, H = 2, 8, 32, 32

    key = jax.random.PRNGKey(0)
    k_h, k_m, k_wih, k_whh, k_bih, k_bhh = jax.random.split(key, 6)

    h_v = jax.random.normal(k_h, (B, N, H), dtype=jnp.float32)
    m_v = jax.random.normal(k_m, (B, N, IN_M), dtype=jnp.float32)

    # Deterministic parameter init mimicking nn.GRU's uniform(-1/sqrt(H), 1/sqrt(H)).
    bound = 1.0 / np.sqrt(H)
    w_ih = jax.random.uniform(k_wih, (3 * H, IN_M), minval=-bound, maxval=bound, dtype=jnp.float32)
    w_hh = jax.random.uniform(k_whh, (3 * H, H), minval=-bound, maxval=bound, dtype=jnp.float32)
    b_ih = jax.random.uniform(k_bih, (3 * H,), minval=-bound, maxval=bound, dtype=jnp.float32)
    b_hh = jax.random.uniform(k_bhh, (3 * H,), minval=-bound, maxval=bound, dtype=jnp.float32)

    # One-time weight prep (transpose / gate-pack / bf16 cast / bias combine).
    params = prepare_gru_params(w_ih, w_hh, b_ih, b_hh)

    out = mpnn_update(h_v, m_v, params)
    out = jax.block_until_ready(out)

    ref = mpnn_update_ref(h_v, m_v, w_ih, w_hh, b_ih, b_hh)
    # bf16 MXU inputs / bf16 output with f32 accumulation -> loosened tolerance.
    np.testing.assert_allclose(np.asarray(out.astype(jnp.float32)), np.asarray(ref),
                               rtol=2e-2, atol=2e-2)

    print("KERNEL_OK")
</pallas_src>

<mosaic_0001>
module attributes {stable_mosaic.version = 11 : i64} {
  func.func @gru_update_kernel(%arg0: i32, %arg1: memref<16x32xbf16, #tpu.memory_space<vmem>>, %arg2: memref<16x32xbf16, #tpu.memory_space<vmem>>, %arg3: memref<32x96xbf16, #tpu.memory_space<vmem>>, %arg4: memref<32x96xbf16, #tpu.memory_space<vmem>>, %arg5: memref<1x96xf32, #tpu.memory_space<vmem>>, %arg6: memref<1x32xf32, #tpu.memory_space<vmem>>, %arg7: memref<16x32xbf16, #tpu.memory_space<vmem>>) attributes {dimension_semantics = [#tpu.dimension_semantics<parallel>], iteration_bounds = array<i64: 1>, scalar_prefetch = 0 : i64, scratch_operands = 0 : i64, tpu.core_type = #tpu.core_type<tc>, window_params = [{transform_indices = @transform_0, window_bounds = array<i64: 16, 32>}, {transform_indices = @transform_1, window_bounds = array<i64: 16, 32>}, {pipeline_mode = #tpu.pipeline_mode<synchronous>, transform_indices = @transform_2, window_bounds = array<i64: 32, 96>}, {pipeline_mode = #tpu.pipeline_mode<synchronous>, transform_indices = @transform_3, window_bounds = array<i64: 32, 96>}, {pipeline_mode = #tpu.pipeline_mode<synchronous>, transform_indices = @transform_4, window_bounds = array<i64: 1, 96>}, {pipeline_mode = #tpu.pipeline_mode<synchronous>, transform_indices = @transform_5, window_bounds = array<i64: 1, 32>}, {transform_indices = @transform_6, window_bounds = array<i64: 16, 32>}]} {
    %c0 = arith.constant 0 : index
    %c0_0 = arith.constant 0 : index
    %0 = vector.load %arg1[%c0, %c0_0] : memref<16x32xbf16, #tpu.memory_space<vmem>>, vector<16x32xbf16>
    %c0_1 = arith.constant 0 : index
    %c0_2 = arith.constant 0 : index
    %1 = vector.load %arg3[%c0_1, %c0_2] : memref<32x96xbf16, #tpu.memory_space<vmem>>, vector<32x96xbf16>
    %cst = arith.constant dense<0.000000e+00> : vector<16x96xf32>
    %2 = tpu.matmul %0, %1, %cst {dimension_numbers = #tpu.dot_dimension_numbers<[1], [0], [0], [1], [0, 0, 1, 1], [], []>} : vector<16x32xbf16>, vector<32x96xbf16>, vector<16x96xf32> -> vector<16x96xf32>
    %c0_3 = arith.constant 0 : index
    %c0_4 = arith.constant 0 : index
    %3 = vector.load %arg5[%c0_3, %c0_4] : memref<1x96xf32, #tpu.memory_space<vmem>>, vector<1x96xf32>
    %4 = vector.broadcast %3 : vector<1x96xf32> to vector<16x96xf32>
    %5 = arith.addf %2, %4 : vector<16x96xf32>
    %c0_5 = arith.constant 0 : index
    %c0_6 = arith.constant 0 : index
    %6 = vector.load %arg2[%c0_5, %c0_6] : memref<16x32xbf16, #tpu.memory_space<vmem>>, vector<16x32xbf16>
    %c0_7 = arith.constant 0 : index
    %c0_8 = arith.constant 0 : index
    %7 = vector.load %arg4[%c0_7, %c0_8] : memref<32x96xbf16, #tpu.memory_space<vmem>>, vector<32x96xbf16>
    %cst_9 = arith.constant dense<0.000000e+00> : vector<16x96xf32>
    %8 = tpu.matmul %6, %7, %cst_9 {dimension_numbers = #tpu.dot_dimension_numbers<[1], [0], [0], [1], [0, 0, 1, 1], [], []>} : vector<16x32xbf16>, vector<32x96xbf16>, vector<16x96xf32> -> vector<16x96xf32>
    %9 = vector.extract_strided_slice %5 {offsets = [0, 0], sizes = [16, 64], strides = [1, 1]} : vector<16x96xf32> to vector<16x64xf32>
    %10 = vector.extract_strided_slice %8 {offsets = [0, 0], sizes = [16, 64], strides = [1, 1]} : vector<16x96xf32> to vector<16x64xf32>
    %11 = arith.addf %9, %10 : vector<16x64xf32>
    %12 = arith.negf %11 : vector<16x64xf32>
    %13 = math.exp %12 : vector<16x64xf32>
    %cst_10 = arith.constant 1.000000e+00 : f32
    %14 = vector.broadcast %cst_10 : f32 to vector<16x64xf32>
    %15 = arith.addf %14, %13 : vector<16x64xf32>
    %16 = arith.divf %14, %15 : vector<16x64xf32>
    %17 = vector.extract_strided_slice %16 {offsets = [0, 0], sizes = [16, 32], strides = [1, 1]} : vector<16x64xf32> to vector<16x32xf32>
    %18 = vector.extract_strided_slice %16 {offsets = [0, 32], sizes = [16, 32], strides = [1, 1]} : vector<16x64xf32> to vector<16x32xf32>
    %19 = vector.extract_strided_slice %5 {offsets = [0, 64], sizes = [16, 32], strides = [1, 1]} : vector<16x96xf32> to vector<16x32xf32>
    %20 = vector.extract_strided_slice %8 {offsets = [0, 64], sizes = [16, 32], strides = [1, 1]} : vector<16x96xf32> to vector<16x32xf32>
    %c0_11 = arith.constant 0 : index
    %c0_12 = arith.constant 0 : index
    %21 = vector.load %arg6[%c0_11, %c0_12] : memref<1x32xf32, #tpu.memory_space<vmem>>, vector<1x32xf32>
    %22 = vector.broadcast %21 : vector<1x32xf32> to vector<16x32xf32>
    %23 = arith.addf %20, %22 : vector<16x32xf32>
    %24 = arith.mulf %17, %23 : vector<16x32xf32>
    %25 = arith.addf %19, %24 : vector<16x32xf32>
    %26 = math.tanh %25 : vector<16x32xf32>
    %c0_13 = arith.constant 0 : index
    %c0_14 = arith.constant 0 : index
    %27 = vector.load %arg2[%c0_13, %c0_14] : memref<16x32xbf16, #tpu.memory_space<vmem>>, vector<16x32xbf16>
    %28 = arith.extf %27 : vector<16x32xbf16> to vector<16x32xf32>
    %29 = arith.subf %28, %26 : vector<16x32xf32>
    %30 = arith.mulf %18, %29 : vector<16x32xf32>
    %31 = arith.addf %26, %30 : vector<16x32xf32>
    %32 = arith.truncf %31 : vector<16x32xf32> to vector<16x32xbf16>
    %c0_15 = arith.constant 0 : index
    %c0_16 = arith.constant 0 : index
    %33 = vector.load %arg7[%c0_15, %c0_16] : memref<16x32xbf16, #tpu.memory_space<vmem>>, vector<16x32xbf16>
    tpu.vector_store %arg7[%c0_15, %c0_16], %32 {strides = array<i32>} : memref<16x32xbf16, #tpu.memory_space<vmem>>, vector<16x32xbf16>,
    return
  }
  func.func @transform_0(%arg0: i32) -> (i32, i32) {
    %c0_i32 = arith.constant 0 : i32
    %c0_i32_0 = arith.constant 0 : i32
    return %arg0, %c0_i32 : i32, i32
  }
  func.func @transform_1(%arg0: i32) -> (i32, i32) {
    %c0_i32 = arith.constant 0 : i32
    %c0_i32_0 = arith.constant 0 : i32
    return %arg0, %c0_i32 : i32, i32
  }
  func.func @transform_2(%arg0: i32) -> (i32, i32) {
    %c0_i32 = arith.constant 0 : i32
    %c0_i32_0 = arith.constant 0 : i32
    %c0_i32_1 = arith.constant 0 : i32
    return %c0_i32, %c0_i32_0 : i32, i32
  }
  func.func @transform_3(%arg0: i32) -> (i32, i32) {
    %c0_i32 = arith.constant 0 : i32
    %c0_i32_0 = arith.constant 0 : i32
    %c0_i32_1 = arith.constant 0 : i32
    return %c0_i32, %c0_i32_0 : i32, i32
  }
  func.func @transform_4(%arg0: i32) -> (i32, i32) {
    %c0_i32 = arith.constant 0 : i32
    %c0_i32_0 = arith.constant 0 : i32
    %c0_i32_1 = arith.constant 0 : i32
    return %c0_i32, %c0_i32_0 : i32, i32
  }
  func.func @transform_5(%arg0: i32) -> (i32, i32) {
    %c0_i32 = arith.constant 0 : i32
    %c0_i32_0 = arith.constant 0 : i32
    %c0_i32_1 = arith.constant 0 : i32
    return %c0_i32, %c0_i32_0 : i32, i32
  }
  func.func @transform_6(%arg0: i32) -> (i32, i32) {
    %c0_i32 = arith.constant 0 : i32
    %c0_i32_0 = arith.constant 0 : i32
    return %arg0, %c0_i32 : i32, i32
  }
}

module attributes {stable_mosaic.version = 11 : i64} {
  func.func @gru_update_kernel(%arg0: i32, %arg1: memref<16x32xbf16, #tpu.memory_space<vmem>>, %arg2: memref<16x32xbf16, #tpu.memory_space<vmem>>, %arg3: memref<32x96xbf16, #tpu.memory_space<vmem>>, %arg4: memref<32x96xbf16, #tpu.memory_space<vmem>>, %arg5: memref<1x96xf32, #tpu.memory_space<vmem>>, %arg6: memref<1x32xf32, #tpu.memory_space<vmem>>, %arg7: memref<16x32xbf16, #tpu.memory_space<vmem>>) attributes {dimension_semantics = [#tpu.dimension_semantics<parallel>], iteration_bounds = array<i64: 1>, scalar_prefetch = 0 : i64, scratch_operands = 0 : i64, tpu.core_type = #tpu.core_type<tc>, window_params = [{transform_indices = @transform_0, window_bounds = array<i64: 16, 32>}, {transform_indices = @transform_1, window_bounds = array<i64: 16, 32>}, {pipeline_mode = #tpu.pipeline_mode<synchronous>, transform_indices = @transform_2, window_bounds = array<i64: 32, 96>}, {pipeline_mode = #tpu.pipeline_mode<synchronous>, transform_indices = @transform_3, window_bounds = array<i64: 32, 96>}, {pipeline_mode = #tpu.pipeline_mode<synchronous>, transform_indices = @transform_4, window_bounds = array<i64: 1, 96>}, {pipeline_mode = #tpu.pipeline_mode<synchronous>, transform_indices = @transform_5, window_bounds = array<i64: 1, 32>}, {transform_indices = @transform_6, window_bounds = array<i64: 16, 32>}]} {
    %c0 = arith.constant 0 : index
    %c0_0 = arith.constant 0 : index
    %0 = vector.load %arg1[%c0, %c0_0] : memref<16x32xbf16, #tpu.memory_space<vmem>>, vector<16x32xbf16>
    %c0_1 = arith.constant 0 : index
    %c0_2 = arith.constant 0 : index
    %1 = vector.load %arg3[%c0_1, %c0_2] : memref<32x96xbf16, #tpu.memory_space<vmem>>, vector<32x96xbf16>
    %cst = arith.constant dense<0.000000e+00> : vector<16x96xf32>
    %2 = tpu.matmul %0, %1, %cst {dimension_numbers = #tpu.dot_dimension_numbers<[1], [0], [0], [1], [0, 0, 1, 1], [], []>} : vector<16x32xbf16>, vector<32x96xbf16>, vector<16x96xf32> -> vector<16x96xf32>
    %c0_3 = arith.constant 0 : index
    %c0_4 = arith.constant 0 : index
    %3 = vector.load %arg5[%c0_3, %c0_4] : memref<1x96xf32, #tpu.memory_space<vmem>>, vector<1x96xf32>
    %4 = vector.broadcast %3 : vector<1x96xf32> to vector<16x96xf32>
    %5 = arith.addf %2, %4 : vector<16x96xf32>
    %c0_5 = arith.constant 0 : index
    %c0_6 = arith.constant 0 : index
    %6 = vector.load %arg2[%c0_5, %c0_6] : memref<16x32xbf16, #tpu.memory_space<vmem>>, vector<16x32xbf16>
    %c0_7 = arith.constant 0 : index
    %c0_8 = arith.constant 0 : index
    %7 = vector.load %arg4[%c0_7, %c0_8] : memref<32x96xbf16, #tpu.memory_space<vmem>>, vector<32x96xbf16>
    %cst_9 = arith.constant dense<0.000000e+00> : vector<16x96xf32>
    %8 = tpu.matmul %6, %7, %cst_9 {dimension_numbers = #tpu.dot_dimension_numbers<[1], [0], [0], [1], [0, 0, 1, 1], [], []>} : vector<16x32xbf16>, vector<32x96xbf16>, vector<16x96xf32> -> vector<16x96xf32>
    %9 = vector.extract_strided_slice %5 {offsets = [0, 0], sizes = [16, 64], strides = [1, 1]} : vector<16x96xf32> to vector<16x64xf32>
    %10 = vector.extract_strided_slice %8 {offsets = [0, 0], sizes = [16, 64], strides = [1, 1]} : vector<16x96xf32> to vector<16x64xf32>
    %11 = arith.addf %9, %10 : vector<16x64xf32>
    %12 = arith.negf %11 : vector<16x64xf32>
    %13 = math.exp %12 : vector<16x64xf32>
    %cst_10 = arith.constant 1.000000e+00 : f32
    %14 = vector.broadcast %cst_10 : f32 to vector<16x64xf32>
    %15 = arith.addf %14, %13 : vector<16x64xf32>
    %16 = arith.divf %14, %15 : vector<16x64xf32>
    %17 = vector.extract_strided_slice %16 {offsets = [0, 0], sizes = [16, 32], strides = [1, 1]} : vector<16x64xf32> to vector<16x32xf32>
    %18 = vector.extract_strided_slice %16 {offsets = [0, 32], sizes = [16, 32], strides = [1, 1]} : vector<16x64xf32> to vector<16x32xf32>
    %19 = vector.extract_strided_slice %5 {offsets = [0, 64], sizes = [16, 32], strides = [1, 1]} : vector<16x96xf32> to vector<16x32xf32>
    %20 = vector.extract_strided_slice %8 {offsets = [0, 64], sizes = [16, 32], strides = [1, 1]} : vector<16x96xf32> to vector<16x32xf32>
    %c0_11 = arith.constant 0 : index
    %c0_12 = arith.constant 0 : index
    %21 = vector.load %arg6[%c0_11, %c0_12] : memref<1x32xf32, #tpu.memory_space<vmem>>, vector<1x32xf32>
    %22 = vector.broadcast %21 : vector<1x32xf32> to vector<16x32xf32>
    %23 = arith.addf %20, %22 : vector<16x32xf32>
    %24 = arith.mulf %17, %23 : vector<16x32xf32>
    %25 = arith.addf %19, %24 : vector<16x32xf32>
    %26 = math.tanh %25 : vector<16x32xf32>
    %c0_13 = arith.constant 0 : index
    %c0_14 = arith.constant 0 : index
    %27 = vector.load %arg2[%c0_13, %c0_14] : memref<16x32xbf16, #tpu.memory_space<vmem>>, vector<16x32xbf16>
    %28 = arith.extf %27 : vector<16x32xbf16> to vector<16x32xf32>
    %29 = arith.subf %28, %26 : vector<16x32xf32>
    %30 = arith.mulf %18, %29 : vector<16x32xf32>
    %31 = arith.addf %26, %30 : vector<16x32xf32>
    %32 = arith.truncf %31 : vector<16x32xf32> to vector<16x32xbf16>
    %c0_15 = arith.constant 0 : index
    %c0_16 = arith.constant 0 : index
    %33 = vector.load %arg7[%c0_15, %c0_16] : memref<16x32xbf16, #tpu.memory_space<vmem>>, vector<16x32xbf16>
    tpu.vector_store %arg7[%c0_15, %c0_16], %32 {strides = array<i32>} : memref<16x32xbf16, #tpu.memory_space<vmem>>, vector<16x32xbf16>,
    return
  }
  func.func @transform_0(%arg0: i32) -> (i32, i32) {
    %c0_i32 = arith.constant 0 : i32
    %c0_i32_0 = arith.constant 0 : i32
    return %arg0, %c0_i32 : i32, i32
  }
  func.func @transform_1(%arg0: i32) -> (i32, i32) {
    %c0_i32 = arith.constant 0 : i32
    %c0_i32_0 = arith.constant 0 : i32
    return %arg0, %c0_i32 : i32, i32
  }
  func.func @transform_2(%arg0: i32) -> (i32, i32) {
    %c0_i32 = arith.constant 0 : i32
    %c0_i32_0 = arith.constant 0 : i32
    %c0_i32_1 = arith.constant 0 : i32
    return %c0_i32, %c0_i32_0 : i32, i32
  }
  func.func @transform_3(%arg0: i32) -> (i32, i32) {
    %c0_i32 = arith.constant 0 : i32
    %c0_i32_0 = arith.constant 0 : i32
    %c0_i32_1 = arith.constant 0 : i32
    return %c0_i32, %c0_i32_0 : i32, i32
  }
  func.func @transform_4(%arg0: i32) -> (i32, i32) {
    %c0_i32 = arith.constant 0 : i32
    %c0_i32_0 = arith.constant 0 : i32
    %c0_i32_1 = arith.constant 0 : i32
    return %c0_i32, %c0_i32_0 : i32, i32
  }
  func.func @transform_5(%arg0: i32) -> (i32, i32) {
    %c0_i32 = arith.constant 0 : i32
    %c0_i32_0 = arith.constant 0 : i32
    %c0_i32_1 = arith.constant 0 : i32
    return %c0_i32, %c0_i32_0 : i32, i32
  }
  func.func @transform_6(%arg0: i32) -> (i32, i32) {
    %c0_i32 = arith.constant 0 : i32
    %c0_i32_0 = arith.constant 0 : i32
    return %arg0, %c0_i32 : i32, i32
  }
}

</mosaic_0001>

<llo_original>
// kernel: tpu_custom_call.1
$region0: #{tpu_custom_call.1}
  #allocation0 [shape = 'u32[]', space=smem, size = 0x4, offset = 0x4, fixed_abs, tag = 'smem constant byte address 0x4 - core index']
  #allocation1 [shape = 'u32[144,128]{1,0:T(1,128)}', space=vmem, size = 0x12000, scoped, tag = 'internal scratch']
  %s0 = inlined_call_operand.hbm [shape: bf16[16,32], index: 0, kind: input, shape index: {}]
  %s1 = inlined_call_operand.hbm [shape: bf16[16,32], index: 1, kind: input, shape index: {}]
  %s2 = inlined_call_operand.hbm [shape: bf16[32,96], index: 2, kind: input, shape index: {}]
  %s3 = inlined_call_operand.hbm [shape: bf16[32,96], index: 3, kind: input, shape index: {}]
  %s4 = inlined_call_operand.vmem [shape: f32[1,96], index: 4, kind: input, shape index: {}]
  %s5 = inlined_call_operand.vmem [shape: f32[1,32], index: 5, kind: input, shape index: {}]
  %s6 = inlined_call_operand.hbm [shape: bf16[16,32], index: 6, kind: output, shape index: {}]
  %s7 = sld [smem:[#allocation0]]
  $region50: #{tpu_custom_call.1} parent=0
    _
  %s9 = ssub.s32 1, %s7
  %s10 = scalar_select 0, %s9, %s7
  $region1: #{tpu_custom_call.1} parent=0
    #allocation2 [shape = 'u8[4096]{0}', space=vmem, size = 0x1000, scoped, tag = 'input window, operand 0, single buffered']
    #allocation3 [shape = 's32[1]{0}', space=sflag, size = 0x4, scoped, tag = 'scoped memory for tpu_custom_call.1']
    #allocation4 [shape = 's32[1]{0}', space=sflag, size = 0x4, scoped, tag = 'scoped memory for tpu_custom_call.1']
    #allocation5 [shape = 'u8[4096]{0}', space=vmem, size = 0x1000, scoped, tag = 'input window, operand 1, single buffered']
    #allocation6 [shape = 's32[1]{0}', space=sflag, size = 0x4, scoped, tag = 'scoped memory for tpu_custom_call.1']
    #allocation7 [shape = 'u8[8192]{0}', space=vmem, size = 0x2000, scoped, tag = 'input window, operand 2, single buffered']
    #allocation8 [shape = 'u8[8192]{0}', space=vmem, size = 0x2000, scoped, tag = 'input window, operand 3, single buffered']
    #allocation9 [shape = 's32[1]{0}', space=sflag, size = 0x4, scoped, tag = 'scoped memory for tpu_custom_call.1']
    #allocation10 [shape = 'u8[4096]{0}', space=vmem, size = 0x1000, scoped, tag = 'output window, operand 0, single buffered']
    %11 = vsyncpa [#allocation3], 0
    %12 = vsyncpa [#allocation6], 0
    %13 = vsyncpa [#allocation9], 0
    %14 = vsyncpa [#allocation4], 0
    // Predicated region
    $region2: #{tpu_custom_call.1} parent=1 // pred_check
      _
    $region3: #{tpu_custom_call.1} parent=1 // pred_check_branch
      %16 = sbr.rel (0) target = $region5
    $region4: #{tpu_custom_call.1} parent=1 // pred_region
      %s18 = ssub.s32 128, 128
      %19 = vsyncadd [#allocation3], %s18
      %s20 = sshll.u32 [#allocation2], 4
      %s21 = int_to_ptr.vmem [resolvable:$true] %s20
      %26 = dma.hbm_to_vmem [thread:$0]  %s0, 128, %s21, [#allocation3], 64, 64, 4
    $region5: #{tpu_custom_call.1} parent=1 // pred_fallthru
      _
    // Predicated region
    $region6: #{tpu_custom_call.1} parent=1 // pred_check
      _
    $region7: #{tpu_custom_call.1} parent=1 // pred_check_branch
      %28 = sbr.rel (0) target = $region9
    $region8: #{tpu_custom_call.1} parent=1 // pred_region
      %s30 = ssub.s32 128, 128
      %31 = vsyncadd [#allocation6], %s30
      %s32 = sshll.u32 [#allocation5], 4
      %s33 = int_to_ptr.vmem [resolvable:$true] %s32
      %38 = dma.hbm_to_vmem [thread:$0]  %s1, 128, %s33, [#allocation6], 64, 64, 4
    $region9: #{tpu_custom_call.1} parent=1 // pred_fallthru
      _
    // Predicated region
    $region10: #{tpu_custom_call.1} parent=1 // pred_check
      _
    $region11: #{tpu_custom_call.1} parent=1 // pred_check_branch
      %40 = sbr.rel (0) target = $region13
    $region12: #{tpu_custom_call.1} parent=1 // pred_region
      %s42 = ssub.s32 256, 256
      %43 = vsyncadd [#allocation6], %s42
      %s44 = sshll.u32 [#allocation7], 4
      %s45 = int_to_ptr.vmem [resolvable:$true] %s44
      %50 = dma.hbm_to_vmem [thread:$0]  %s2, 256, %s45, [#allocation6], 64, 64, 4
    $region13: #{tpu_custom_call.1} parent=1 // pred_fallthru
      _
    // Predicated region
    $region14: #{tpu_custom_call.1} parent=1 // pred_check
      _
    $region15: #{tpu_custom_call.1} parent=1 // pred_check_branch
      %52 = sbr.rel (0) target = $region17
    $region16: #{tpu_custom_call.1} parent=1 // pred_region
      %s54 = ssub.s32 256, 256
      %55 = vsyncadd [#allocation9], %s54
      %s56 = sshll.u32 [#allocation8], 4
      %s57 = int_to_ptr.vmem [resolvable:$true] %s56
      %62 = dma.hbm_to_vmem [thread:$0]  %s3, 256, %s57, [#allocation9], 64, 64, 4
    $region17: #{tpu_custom_call.1} parent=1 // pred_fallthru
      _
    // Predicated region
    $region18: #{tpu_custom_call.1} parent=1 // pred_check
      _
    $region19: #{tpu_custom_call.1} parent=1 // pred_check_branch
      %64 = sbr.rel (0) target = $region21
    $region20: #{tpu_custom_call.1} parent=1 // pred_region
      _
    $region21: #{tpu_custom_call.1} parent=1 // pred_fallthru
      _
    // Predicated region
    $region22: #{tpu_custom_call.1} parent=1 // pred_check
      _
    $region23: #{tpu_custom_call.1} parent=1 // pred_check_branch
      %66 = sbr.rel (0) target = $region25
    $region24: #{tpu_custom_call.1} parent=1 // pred_region
      _
    $region25: #{tpu_custom_call.1} parent=1 // pred_fallthru
      _
    // Predicated region
    $region26: #{tpu_custom_call.1} parent=1 // pred_check
      _
    $region27: #{tpu_custom_call.1} parent=1 // pred_check_branch
      %68 = sbr.rel (0) target = $region29
    $region28: #{tpu_custom_call.1} parent=1 // pred_region
      %69 = dma.done [#allocation3], 128
    $region29: #{tpu_custom_call.1} parent=1 // pred_fallthru
      _
    // Predicated region
    $region30: #{tpu_custom_call.1} parent=1 // pred_check
      _
    $region31: #{tpu_custom_call.1} parent=1 // pred_check_branch
      %71 = sbr.rel (0) target = $region33
    $region32: #{tpu_custom_call.1} parent=1 // pred_region
      %72 = dma.done [#allocation6], 128
    $region33: #{tpu_custom_call.1} parent=1 // pred_fallthru
      _
    // Predicated region
    $region34: #{tpu_custom_call.1} parent=1 // pred_check
      _
    $region35: #{tpu_custom_call.1} parent=1 // pred_check_branch
      %74 = sbr.rel (0) target = $region37
    $region36: #{tpu_custom_call.1} parent=1 // pred_region
      %75 = dma.done [#allocation6], 256
    $region37: #{tpu_custom_call.1} parent=1 // pred_fallthru
      _
    // Predicated region
    $region38: #{tpu_custom_call.1} parent=1 // pred_check
      _
    $region39: #{tpu_custom_call.1} parent=1 // pred_check_branch
      %77 = sbr.rel (0) target = $region41
    $region40: #{tpu_custom_call.1} parent=1 // pred_region
      %78 = dma.done [#allocation9], 256
    $region41: #{tpu_custom_call.1} parent=1 // pred_fallthru
      _
    %v80 = vld [vmem:[#allocation2] sm:$0xf]
    %v81 = vld [vmem:[#allocation2 + $0x4] sm:$0xf]
    %v82 = vld [vmem:[#allocation7] sm:$0xf]
    %v83 = vld [vmem:[#allocation7 + $0x4] sm:$0xf]
    %v84 = vld [vmem:[#allocation7 + $0x8] sm:$0xf]
    %v85 = vld [vmem:[#allocation7 + $0xc] sm:$0xf]
    %v86 = vld [vmem:[%s4] sm:$0x1]
    %v88 = vlaneseq
    %v89 = vshrl.u32 %v88, 7
    %v90 = vsub.s32 0, %v89
    %v91 = vrot.slane %v86, %v90
    %v95 = vunpack.c.l.b16 %v80
    %v96 = vunpack.c.l.b16 %v81
    %v97 = vpack.c.b16 %v96, %v95
    %v102 = vunpack.c.l.b16 %v82
    %v103 = vunpack.c.l.b16 %v83
    %v104 = vunpack.c.l.b16 %v84
    %v105 = vunpack.c.l.b16 %v85
    %v106 = vpack.c.b16 %v103, %v102
    %v107 = vpack.c.b16 %v105, %v104
    %vm110 = vcmask 261120
    %v112 = vsel %vm110, %v97, 0
    %114 = vmatprep.subr.bf16.mxu0 0
    %115 = vmatpush1.bf16.msra.mxu0 0
    %116 = vmatprep.subr.bf16.mxu0 0
    %117 = vmatpush1.bf16.msra.mxu0 0
    %118 = vmatprep.subr.bf16.mxu0 0
    %119 = vmatpush1.bf16.msra.mxu0 0
    %120 = vmatprep.subr.bf16.mxu0 0
    %121 = vmatpush1.bf16.msra.mxu0 0
    %122 = vmatprep.subr.bf16.mxu0 0
    %123 = vmatpush1.bf16.msra.mxu0 0
    %124 = vmatprep.subr.bf16.mxu0 0
    %125 = vmatpush1.bf16.msra.mxu0 0
    %126 = vmatprep.subr.bf16.mxu0 0
    %127 = vmatpush1.bf16.msra.mxu0 %v107
    %128 = vmatprep.subr.bf16.mxu0 0
    %129 = vmatpush1.bf16.msra.mxu0 %v106
    %130 = vmatprep.subr.bf16.mxu0 0
    %131 = vmatpush2.bf16.msra.mxu0 0
    %132 = vmatprep.subr.bf16.mxu0 0
    %133 = vmatpush2.bf16.msra.mxu0 0
    %134 = vmatprep.subr.bf16.mxu0 0
    %135 = vmatpush2.bf16.msra.mxu0 0
    %136 = vmatprep.subr.bf16.mxu0 0
    %137 = vmatpush2.bf16.msra.mxu0 0
    %138 = vmatprep.subr.bf16.mxu0 0
    %139 = vmatpush2.bf16.msra.mxu0 0
    %140 = vmatprep.subr.bf16.mxu0 0
    %141 = vmatpush2.bf16.msra.mxu0 0
    %142 = vmatprep.subr.bf16.mxu0 0
    %143 = vmatpush2.bf16.msra.mxu0 0
    %144 = vmatprep.subr.bf16.mxu0 0
    %145 = vmatpush2.bf16.msra.mxu0 0
    %146 = vmatprep.mubr.bf16.mxu0 0
    %147 = vmatmul.mubr.bf16.gmra.mxu0 %v112
    %v148 = vpop.f32.mrf.mxu0
    %v149 = vadd.f32 %v91, %v148
    %v150 = vpop.f32.mrf.mxu0
    %v151 = vpop.f32.mrf.mxu0
    %v152 = vadd.f32 %v91, %v151
    %v153 = vpop.f32.mrf.mxu0
    %154 = vdwg.mxu0
    %v155 = vld [vmem:[#allocation5] sm:$0xf]
    %v156 = vld [vmem:[#allocation5 + $0x4] sm:$0xf]
    %v157 = vld [vmem:[#allocation8] sm:$0xf]
    %v158 = vld [vmem:[#allocation8 + $0x4] sm:$0xf]
    %v159 = vld [vmem:[#allocation8 + $0x8] sm:$0xf]
    %v160 = vld [vmem:[#allocation8 + $0xc] sm:$0xf]
    %v163 = vunpack.c.l.b16 %v155
    %v164 = vunpack.c.l.b16 %v156
    %v165 = vpack.c.b16 %v164, %v163
    %v170 = vunpack.c.l.b16 %v157
    %v171 = vunpack.c.l.b16 %v158
    %v172 = vunpack.c.l.b16 %v159
    %v173 = vunpack.c.l.b16 %v160
    %v174 = vpack.c.b16 %v171, %v170
    %v175 = vpack.c.b16 %v173, %v172
    %v179 = vsel %vm110, %v165, 0
    %181 = vmatprep.subr.bf16.mxu0 0
    %182 = vmatpush1.bf16.msra.mxu0 0
    %183 = vmatprep.subr.bf16.mxu0 0
    %184 = vmatpush1.bf16.msra.mxu0 0
    %185 = vmatprep.subr.bf16.mxu0 0
    %186 = vmatpush1.bf16.msra.mxu0 0
    %187 = vmatprep.subr.bf16.mxu0 0
    %188 = vmatpush1.bf16.msra.mxu0 0
    %189 = vmatprep.subr.bf16.mxu0 0
    %190 = vmatpush1.bf16.msra.mxu0 0
    %191 = vmatprep.subr.bf16.mxu0 0
    %192 = vmatpush1.bf16.msra.mxu0 0
    %193 = vmatprep.subr.bf16.mxu0 0
    %194 = vmatpush1.bf16.msra.mxu0 %v175
    %195 = vmatprep.subr.bf16.mxu0 0
    %196 = vmatpush1.bf16.msra.mxu0 %v174
    %197 = vmatprep.subr.bf16.mxu0 0
    %198 = vmatpush2.bf16.msra.mxu0 0
    %199 = vmatprep.subr.bf16.mxu0 0
    %200 = vmatpush2.bf16.msra.mxu0 0
    %201 = vmatprep.subr.bf16.mxu0 0
    %202 = vmatpush2.bf16.msra.mxu0 0
    %203 = vmatprep.subr.bf16.mxu0 0
    %204 = vmatpush2.bf16.msra.mxu0 0
    %205 = vmatprep.subr.bf16.mxu0 0
    %206 = vmatpush2.bf16.msra.mxu0 0
    %207 = vmatprep.subr.bf16.mxu0 0
    %208 = vmatpush2.bf16.msra.mxu0 0
    %209 = vmatprep.subr.bf16.mxu0 0
    %210 = vmatpush2.bf16.msra.mxu0 0
    %211 = vmatprep.subr.bf16.mxu0 0
    %212 = vmatpush2.bf16.msra.mxu0 0
    %213 = vmatprep.mubr.bf16.mxu0 0
    %214 = vmatmul.mubr.bf16.gmra.mxu0 %v179
    %v215 = vpop.f32.mrf.mxu0
    %v216 = vadd.f32 0.0, %v215
    %v217 = vpop.f32.mrf.mxu0
    %v218 = vpop.f32.mrf.mxu0
    %v219 = vadd.f32 0.0, %v218
    %v220 = vpop.f32.mrf.mxu0
    %221 = vdwg.mxu0
    %v222 = vadd.f32 %v149, %v216
    %v223 = vadd.f32 %v152, %v219
    %v224 = vxor.u32 %v222, 2147483648
    %v225 = vxor.u32 %v223, 2147483648
    %v226 = vmul.f32 %v224, 1.442695
    %v227 = vpow.pop %v226
    %v228 = vmul.f32 %v225, 1.442695
    %v229 = vpow.pop %v228
    %v230 = vadd.f32 %v227, 1.0
    %v231 = vadd.f32 %v229, 1.0
    %v232 = vrcp.pop %v230
    %v233 = vmul.f32 1.0, %v232
    %v234 = vrcp.pop %v231
    %v235 = vmul.f32 1.0, %v234
    %v236 = vld [vmem:[%s5] sm:$0x1]
    %v238 = vlaneseq
    %v239 = vshrl.u32 %v238, 7
    %v240 = vsub.s32 0, %v239
    %v241 = vrot.slane %v236, %v240
    %242 = vrot.lane.b32.xlu0 %v241, 64
    %v243 = vpop.permute.xlu0 %242
    %v245 = vadd.f32 %v216, %v243
    %v246 = vadd.f32 %v219, %v243
    %249 = vrot.lane.b32.xlu0 %v245, 64
    %v250 = vpop.permute.xlu0 %249
    %251 = vrot.lane.b32.xlu0 %v246, 64
    %v252 = vpop.permute.xlu0 %251
    %v255 = vmul.f32 %v233, %v250
    %v256 = vmul.f32 %v235, %v252
    %259 = vrot.lane.b32.xlu0 %v255, 64
    %v260 = vpop.permute.xlu0 %259
    %261 = vrot.lane.b32.xlu0 %v256, 64
    %v262 = vpop.permute.xlu0 %261
    %v265 = vadd.f32 %v149, %v260
    %v266 = vadd.f32 %v152, %v262
    %v267 = vtanh.pop %v265
    %v268 = vtanh.pop %v266
    %v269 = vunpack.c.l.bf16 %v155
    %v270 = vunpack.c.l.bf16 %v156
    %273 = vrot.lane.b32.xlu0 %v267, 64
    %v274 = vpop.permute.xlu0 %273
    %275 = vrot.lane.b32.xlu0 %v268, 64
    %v276 = vpop.permute.xlu0 %275
    %v279 = vsub.f32 %v269, %v274
    %v280 = vsub.f32 %v270, %v276
    %283 = vrot.lane.b32.xlu0 %v279, 32
    %v284 = vpop.permute.xlu0 %283
    %285 = vrot.lane.b32.xlu0 %v280, 32
    %v286 = vpop.permute.xlu0 %285
    %v289 = vmul.f32 %v233, %v284
    %v290 = vmul.f32 %v235, %v286
    %293 = vrot.lane.b32.xlu0 %v289, 32
    %v294 = vpop.permute.xlu0 %293
    %295 = vrot.lane.b32.xlu0 %v290, 32
    %v296 = vpop.permute.xlu0 %295
    %v299 = vadd.f32 %v267, %v294
    %v300 = vadd.f32 %v268, %v296
    %v301 = vpack.c.bf16 %v300, %v299
    %v303 = vunpack.c.l.b16 %v301
    %v304 = vunpack.c.h.b16 %v301
    %v305 = vpack.c.b16 %v303, %v303
    %v306 = vpack.c.b16 %v304, %v304
    %307 = vrot.lane.b32.xlu0 %v305, 64
    %v308 = vpop.permute.xlu0 %307
    %309 = vrot.lane.b32.xlu0 %v306, 64
    %v310 = vpop.permute.xlu0 %309
    %vm313 = vcmask 257024
    %314 = vst.msk [vmem:[#allocation10] sm:$0xf] %vm313, %v308
    %315 = vst.msk [vmem:[#allocation10 + $0x4] sm:$0xf] %vm313, %v310
    // Predicated region
    $region42: #{tpu_custom_call.1} parent=1 // pred_check
      _
    $region43: #{tpu_custom_call.1} parent=1 // pred_check_branch
      %317 = sbr.rel (0) target = $region45
    $region44: #{tpu_custom_call.1} parent=1 // pred_region
      %s319 = ssub.s32 128, 128
      %320 = vsyncadd [#allocation4], %s319
      %s321 = sshll.u32 [#allocation10], 4
      %s322 = int_to_ptr.vmem [resolvable:$true] %s321
      %327 = dma.vmem_to_hbm [thread:$0]  %s322, 128, %s6, [#allocation4], 64, 64, 4
    $region45: #{tpu_custom_call.1} parent=1 // pred_fallthru
      _
    // Predicated region
    $region46: #{tpu_custom_call.1} parent=1 // pred_check
      _
    $region47: #{tpu_custom_call.1} parent=1 // pred_check_branch
      %329 = sbr.rel (0) target = $region49
    $region48: #{tpu_custom_call.1} parent=1 // pred_region
      %330 = dma.done [#allocation4], 128
    $region49: #{tpu_custom_call.1} parent=1 // pred_fallthru
      _
    %331 = vsyncpa [#allocation3], 1
    %332 = vsyncpa [#allocation6], 1
    %333 = vsyncpa [#allocation9], 1
    %334 = vsyncpa [#allocation4], 1

// kernel: tpu_custom_call.1
$region0: #{tpu_custom_call.1}
  #allocation0 [shape = 'u32[]', space=smem, size = 0x4, offset = 0x4, fixed_abs, tag = 'smem constant byte address 0x4 - core index']
  #allocation1 [shape = 'u32[144,128]{1,0:T(1,128)}', space=vmem, size = 0x12000, scoped, tag = 'internal scratch']
  %s0 = inlined_call_operand.hbm [shape: bf16[16,32], index: 0, kind: input, shape index: {}]
  %s1 = inlined_call_operand.hbm [shape: bf16[16,32], index: 1, kind: input, shape index: {}]
  %s2 = inlined_call_operand.hbm [shape: bf16[32,96], index: 2, kind: input, shape index: {}]
  %s3 = inlined_call_operand.hbm [shape: bf16[32,96], index: 3, kind: input, shape index: {}]
  %s4 = inlined_call_operand.vmem [shape: f32[1,96], index: 4, kind: input, shape index: {}]
  %s5 = inlined_call_operand.vmem [shape: f32[1,32], index: 5, kind: input, shape index: {}]
  %s6 = inlined_call_operand.hbm [shape: bf16[16,32], index: 6, kind: output, shape index: {}]
  %s7 = sld [smem:[#allocation0]]
  $region50: #{tpu_custom_call.1} parent=0
    _
  %s9 = ssub.s32 1, %s7
  %s10 = scalar_select 0, %s9, %s7
  $region1: #{tpu_custom_call.1} parent=0
    #allocation2 [shape = 'u8[4096]{0}', space=vmem, size = 0x1000, scoped, tag = 'input window, operand 0, single buffered']
    #allocation3 [shape = 's32[1]{0}', space=sflag, size = 0x4, scoped, tag = 'scoped memory for tpu_custom_call.1']
    #allocation4 [shape = 's32[1]{0}', space=sflag, size = 0x4, scoped, tag = 'scoped memory for tpu_custom_call.1']
    #allocation5 [shape = 'u8[4096]{0}', space=vmem, size = 0x1000, scoped, tag = 'input window, operand 1, single buffered']
    #allocation6 [shape = 's32[1]{0}', space=sflag, size = 0x4, scoped, tag = 'scoped memory for tpu_custom_call.1']
    #allocation7 [shape = 'u8[8192]{0}', space=vmem, size = 0x2000, scoped, tag = 'input window, operand 2, single buffered']
    #allocation8 [shape = 'u8[8192]{0}', space=vmem, size = 0x2000, scoped, tag = 'input window, operand 3, single buffered']
    #allocation9 [shape = 's32[1]{0}', space=sflag, size = 0x4, scoped, tag = 'scoped memory for tpu_custom_call.1']
    #allocation10 [shape = 'u8[4096]{0}', space=vmem, size = 0x1000, scoped, tag = 'output window, operand 0, single buffered']
    %11 = vsyncpa [#allocation3], 0
    %12 = vsyncpa [#allocation6], 0
    %13 = vsyncpa [#allocation9], 0
    %14 = vsyncpa [#allocation4], 0
    // Predicated region
    $region2: #{tpu_custom_call.1} parent=1 // pred_check
      _
    $region3: #{tpu_custom_call.1} parent=1 // pred_check_branch
      %16 = sbr.rel (0) target = $region5
    $region4: #{tpu_custom_call.1} parent=1 // pred_region
      %s18 = ssub.s32 128, 128
      %19 = vsyncadd [#allocation3], %s18
      %s20 = sshll.u32 [#allocation2], 4
      %s21 = int_to_ptr.vmem [resolvable:$true] %s20
      %26 = dma.hbm_to_vmem [thread:$0]  %s0, 128, %s21, [#allocation3], 64, 64, 4
    $region5: #{tpu_custom_call.1} parent=1 // pred_fallthru
      _
    // Predicated region
    $region6: #{tpu_custom_call.1} parent=1 // pred_check
      _
    $region7: #{tpu_custom_call.1} parent=1 // pred_check_branch
      %28 = sbr.rel (0) target = $region9
    $region8: #{tpu_custom_call.1} parent=1 // pred_region
      %s30 = ssub.s32 128, 128
      %31 = vsyncadd [#allocation6], %s30
      %s32 = sshll.u32 [#allocation5], 4
      %s33 = int_to_ptr.vmem [resolvable:$true] %s32
      %38 = dma.hbm_to_vmem [thread:$0]  %s1, 128, %s33, [#allocation6], 64, 64, 4
    $region9: #{tpu_custom_call.1} parent=1 // pred_fallthru
      _
    // Predicated region
    $region10: #{tpu_custom_call.1} parent=1 // pred_check
      _
    $region11: #{tpu_custom_call.1} parent=1 // pred_check_branch
      %40 = sbr.rel (0) target = $region13
    $region12: #{tpu_custom_call.1} parent=1 // pred_region
      %s42 = ssub.s32 256, 256
      %43 = vsyncadd [#allocation6], %s42
      %s44 = sshll.u32 [#allocation7], 4
      %s45 = int_to_ptr.vmem [resolvable:$true] %s44
      %50 = dma.hbm_to_vmem [thread:$0]  %s2, 256, %s45, [#allocation6], 64, 64, 4
    $region13: #{tpu_custom_call.1} parent=1 // pred_fallthru
      _
    // Predicated region
    $region14: #{tpu_custom_call.1} parent=1 // pred_check
      _
    $region15: #{tpu_custom_call.1} parent=1 // pred_check_branch
      %52 = sbr.rel (0) target = $region17
    $region16: #{tpu_custom_call.1} parent=1 // pred_region
      %s54 = ssub.s32 256, 256
      %55 = vsyncadd [#allocation9], %s54
      %s56 = sshll.u32 [#allocation8], 4
      %s57 = int_to_ptr.vmem [resolvable:$true] %s56
      %62 = dma.hbm_to_vmem [thread:$0]  %s3, 256, %s57, [#allocation9], 64, 64, 4
    $region17: #{tpu_custom_call.1} parent=1 // pred_fallthru
      _
    // Predicated region
    $region18: #{tpu_custom_call.1} parent=1 // pred_check
      _
    $region19: #{tpu_custom_call.1} parent=1 // pred_check_branch
      %64 = sbr.rel (0) target = $region21
    $region20: #{tpu_custom_call.1} parent=1 // pred_region
      _
    $region21: #{tpu_custom_call.1} parent=1 // pred_fallthru
      _
    // Predicated region
    $region22: #{tpu_custom_call.1} parent=1 // pred_check
      _
    $region23: #{tpu_custom_call.1} parent=1 // pred_check_branch
      %66 = sbr.rel (0) target = $region25
    $region24: #{tpu_custom_call.1} parent=1 // pred_region
      _
    $region25: #{tpu_custom_call.1} parent=1 // pred_fallthru
      _
    // Predicated region
    $region26: #{tpu_custom_call.1} parent=1 // pred_check
      _
    $region27: #{tpu_custom_call.1} parent=1 // pred_check_branch
      %68 = sbr.rel (0) target = $region29
    $region28: #{tpu_custom_call.1} parent=1 // pred_region
      %69 = dma.done [#allocation3], 128
    $region29: #{tpu_custom_call.1} parent=1 // pred_fallthru
      _
    // Predicated region
    $region30: #{tpu_custom_call.1} parent=1 // pred_check
      _
    $region31: #{tpu_custom_call.1} parent=1 // pred_check_branch
      %71 = sbr.rel (0) target = $region33
    $region32: #{tpu_custom_call.1} parent=1 // pred_region
      %72 = dma.done [#allocation6], 128
    $region33: #{tpu_custom_call.1} parent=1 // pred_fallthru
      _
    // Predicated region
    $region34: #{tpu_custom_call.1} parent=1 // pred_check
      _
    $region35: #{tpu_custom_call.1} parent=1 // pred_check_branch
      %74 = sbr.rel (0) target = $region37
    $region36: #{tpu_custom_call.1} parent=1 // pred_region
      %75 = dma.done [#allocation6], 256
    $region37: #{tpu_custom_call.1} parent=1 // pred_fallthru
      _
    // Predicated region
    $region38: #{tpu_custom_call.1} parent=1 // pred_check
      _
    $region39: #{tpu_custom_call.1} parent=1 // pred_check_branch
      %77 = sbr.rel (0) target = $region41
    $region40: #{tpu_custom_call.1} parent=1 // pred_region
      %78 = dma.done [#allocation9], 256
    $region41: #{tpu_custom_call.1} parent=1 // pred_fallthru
      _
    %v80 = vld [vmem:[#allocation2] sm:$0xf]
    %v81 = vld [vmem:[#allocation2 + $0x4] sm:$0xf]
    %v82 = vld [vmem:[#allocation7] sm:$0xf]
    %v83 = vld [vmem:[#allocation7 + $0x4] sm:$0xf]
    %v84 = vld [vmem:[#allocation7 + $0x8] sm:$0xf]
    %v85 = vld [vmem:[#allocation7 + $0xc] sm:$0xf]
    %v86 = vld [vmem:[%s4] sm:$0x1]
    %v88 = vlaneseq
    %v89 = vshrl.u32 %v88, 7
    %v90 = vsub.s32 0, %v89
    %v91 = vrot.slane %v86, %v90
    %v95 = vunpack.c.l.b16 %v80
    %v96 = vunpack.c.l.b16 %v81
    %v97 = vpack.c.b16 %v96, %v95
    %v102 = vunpack.c.l.b16 %v82
    %v103 = vunpack.c.l.b16 %v83
    %v104 = vunpack.c.l.b16 %v84
    %v105 = vunpack.c.l.b16 %v85
    %v106 = vpack.c.b16 %v103, %v102
    %v107 = vpack.c.b16 %v105, %v104
    %vm110 = vcmask 261120
    %v112 = vsel %vm110, %v97, 0
    %114 = vmatprep.subr.bf16.mxu0 0
    %115 = vmatpush1.bf16.msra.mxu0 0
    %116 = vmatprep.subr.bf16.mxu0 0
    %117 = vmatpush1.bf16.msra.mxu0 0
    %118 = vmatprep.subr.bf16.mxu0 0
    %119 = vmatpush1.bf16.msra.mxu0 0
    %120 = vmatprep.subr.bf16.mxu0 0
    %121 = vmatpush1.bf16.msra.mxu0 0
    %122 = vmatprep.subr.bf16.mxu0 0
    %123 = vmatpush1.bf16.msra.mxu0 0
    %124 = vmatprep.subr.bf16.mxu0 0
    %125 = vmatpush1.bf16.msra.mxu0 0
    %126 = vmatprep.subr.bf16.mxu0 0
    %127 = vmatpush1.bf16.msra.mxu0 %v107
    %128 = vmatprep.subr.bf16.mxu0 0
    %129 = vmatpush1.bf16.msra.mxu0 %v106
    %130 = vmatprep.subr.bf16.mxu0 0
    %131 = vmatpush2.bf16.msra.mxu0 0
    %132 = vmatprep.subr.bf16.mxu0 0
    %133 = vmatpush2.bf16.msra.mxu0 0
    %134 = vmatprep.subr.bf16.mxu0 0
    %135 = vmatpush2.bf16.msra.mxu0 0
    %136 = vmatprep.subr.bf16.mxu0 0
    %137 = vmatpush2.bf16.msra.mxu0 0
    %138 = vmatprep.subr.bf16.mxu0 0
    %139 = vmatpush2.bf16.msra.mxu0 0
    %140 = vmatprep.subr.bf16.mxu0 0
    %141 = vmatpush2.bf16.msra.mxu0 0
    %142 = vmatprep.subr.bf16.mxu0 0
    %143 = vmatpush2.bf16.msra.mxu0 0
    %144 = vmatprep.subr.bf16.mxu0 0
    %145 = vmatpush2.bf16.msra.mxu0 0
    %146 = vmatprep.mubr.bf16.mxu0 0
    %147 = vmatmul.mubr.bf16.gmra.mxu0 %v112
    %v148 = vpop.f32.mrf.mxu0
    %v149 = vadd.f32 %v91, %v148
    %v150 = vpop.f32.mrf.mxu0
    %v151 = vpop.f32.mrf.mxu0
    %v152 = vadd.f32 %v91, %v151
    %v153 = vpop.f32.mrf.mxu0
    %154 = vdwg.mxu0
    %v155 = vld [vmem:[#allocation5] sm:$0xf]
    %v156 = vld [vmem:[#allocation5 + $0x4] sm:$0xf]
    %v157 = vld [vmem:[#allocation8] sm:$0xf]
    %v158 = vld [vmem:[#allocation8 + $0x4] sm:$0xf]
    %v159 = vld [vmem:[#allocation8 + $0x8] sm:$0xf]
    %v160 = vld [vmem:[#allocation8 + $0xc] sm:$0xf]
    %v163 = vunpack.c.l.b16 %v155
    %v164 = vunpack.c.l.b16 %v156
    %v165 = vpack.c.b16 %v164, %v163
    %v170 = vunpack.c.l.b16 %v157
    %v171 = vunpack.c.l.b16 %v158
    %v172 = vunpack.c.l.b16 %v159
    %v173 = vunpack.c.l.b16 %v160
    %v174 = vpack.c.b16 %v171, %v170
    %v175 = vpack.c.b16 %v173, %v172
    %v179 = vsel %vm110, %v165, 0
    %181 = vmatprep.subr.bf16.mxu0 0
    %182 = vmatpush1.bf16.msra.mxu0 0
    %183 = vmatprep.subr.bf16.mxu0 0
    %184 = vmatpush1.bf16.msra.mxu0 0
    %185 = vmatprep.subr.bf16.mxu0 0
    %186 = vmatpush1.bf16.msra.mxu0 0
    %187 = vmatprep.subr.bf16.mxu0 0
    %188 = vmatpush1.bf16.msra.mxu0 0
    %189 = vmatprep.subr.bf16.mxu0 0
    %190 = vmatpush1.bf16.msra.mxu0 0
    %191 = vmatprep.subr.bf16.mxu0 0
    %192 = vmatpush1.bf16.msra.mxu0 0
    %193 = vmatprep.subr.bf16.mxu0 0
    %194 = vmatpush1.bf16.msra.mxu0 %v175
    %195 = vmatprep.subr.bf16.mxu0 0
    %196 = vmatpush1.bf16.msra.mxu0 %v174
    %197 = vmatprep.subr.bf16.mxu0 0
    %198 = vmatpush2.bf16.msra.mxu0 0
    %199 = vmatprep.subr.bf16.mxu0 0
    %200 = vmatpush2.bf16.msra.mxu0 0
    %201 = vmatprep.subr.bf16.mxu0 0
    %202 = vmatpush2.bf16.msra.mxu0 0
    %203 = vmatprep.subr.bf16.mxu0 0
    %204 = vmatpush2.bf16.msra.mxu0 0
    %205 = vmatprep.subr.bf16.mxu0 0
    %206 = vmatpush2.bf16.msra.mxu0 0
    %207 = vmatprep.subr.bf16.mxu0 0
    %208 = vmatpush2.bf16.msra.mxu0 0
    %209 = vmatprep.subr.bf16.mxu0 0
    %210 = vmatpush2.bf16.msra.mxu0 0
    %211 = vmatprep.subr.bf16.mxu0 0
    %212 = vmatpush2.bf16.msra.mxu0 0
    %213 = vmatprep.mubr.bf16.mxu0 0
    %214 = vmatmul.mubr.bf16.gmra.mxu0 %v179
    %v215 = vpop.f32.mrf.mxu0
    %v216 = vadd.f32 0.0, %v215
    %v217 = vpop.f32.mrf.mxu0
    %v218 = vpop.f32.mrf.mxu0
    %v219 = vadd.f32 0.0, %v218
    %v220 = vpop.f32.mrf.mxu0
    %221 = vdwg.mxu0
    %v222 = vadd.f32 %v149, %v216
    %v223 = vadd.f32 %v152, %v219
    %v224 = vxor.u32 %v222, 2147483648
    %v225 = vxor.u32 %v223, 2147483648
    %v226 = vmul.f32 %v224, 1.442695
    %v227 = vpow.pop %v226
    %v228 = vmul.f32 %v225, 1.442695
    %v229 = vpow.pop %v228
    %v230 = vadd.f32 %v227, 1.0
    %v231 = vadd.f32 %v229, 1.0
    %v232 = vrcp.pop %v230
    %v233 = vmul.f32 1.0, %v232
    %v234 = vrcp.pop %v231
    %v235 = vmul.f32 1.0, %v234
    %v236 = vld [vmem:[%s5] sm:$0x1]
    %v238 = vlaneseq
    %v239 = vshrl.u32 %v238, 7
    %v240 = vsub.s32 0, %v239
    %v241 = vrot.slane %v236, %v240
    %242 = vrot.lane.b32.xlu0 %v241, 64
    %v243 = vpop.permute.xlu0 %242
    %v245 = vadd.f32 %v216, %v243
    %v246 = vadd.f32 %v219, %v243
    %249 = vrot.lane.b32.xlu0 %v245, 64
    %v250 = vpop.permute.xlu0 %249
    %251 = vrot.lane.b32.xlu0 %v246, 64
    %v252 = vpop.permute.xlu0 %251
    %v255 = vmul.f32 %v233, %v250
    %v256 = vmul.f32 %v235, %v252
    %259 = vrot.lane.b32.xlu0 %v255, 64
    %v260 = vpop.permute.xlu0 %259
    %261 = vrot.lane.b32.xlu0 %v256, 64
    %v262 = vpop.permute.xlu0 %261
    %v265 = vadd.f32 %v149, %v260
    %v266 = vadd.f32 %v152, %v262
    %v267 = vtanh.pop %v265
    %v268 = vtanh.pop %v266
    %v269 = vunpack.c.l.bf16 %v155
    %v270 = vunpack.c.l.bf16 %v156
    %273 = vrot.lane.b32.xlu0 %v267, 64
    %v274 = vpop.permute.xlu0 %273
    %275 = vrot.lane.b32.xlu0 %v268, 64
    %v276 = vpop.permute.xlu0 %275
    %v279 = vsub.f32 %v269, %v274
    %v280 = vsub.f32 %v270, %v276
    %283 = vrot.lane.b32.xlu0 %v279, 32
    %v284 = vpop.permute.xlu0 %283
    %285 = vrot.lane.b32.xlu0 %v280, 32
    %v286 = vpop.permute.xlu0 %285
    %v289 = vmul.f32 %v233, %v284
    %v290 = vmul.f32 %v235, %v286
    %293 = vrot.lane.b32.xlu0 %v289, 32
    %v294 = vpop.permute.xlu0 %293
    %295 = vrot.lane.b32.xlu0 %v290, 32
    %v296 = vpop.permute.xlu0 %295
    %v299 = vadd.f32 %v267, %v294
    %v300 = vadd.f32 %v268, %v296
    %v301 = vpack.c.bf16 %v300, %v299
    %v303 = vunpack.c.l.b16 %v301
    %v304 = vunpack.c.h.b16 %v301
    %v305 = vpack.c.b16 %v303, %v303
    %v306 = vpack.c.b16 %v304, %v304
    %307 = vrot.lane.b32.xlu0 %v305, 64
    %v308 = vpop.permute.xlu0 %307
    %309 = vrot.lane.b32.xlu0 %v306, 64
    %v310 = vpop.permute.xlu0 %309
    %vm313 = vcmask 257024
    %314 = vst.msk [vmem:[#allocation10] sm:$0xf] %vm313, %v308
    %315 = vst.msk [vmem:[#allocation10 + $0x4] sm:$0xf] %vm313, %v310
    // Predicated region
    $region42: #{tpu_custom_call.1} parent=1 // pred_check
      _
    $region43: #{tpu_custom_call.1} parent=1 // pred_check_branch
      %317 = sbr.rel (0) target = $region45
    $region44: #{tpu_custom_call.1} parent=1 // pred_region
      %s319 = ssub.s32 128, 128
      %320 = vsyncadd [#allocation4], %s319
      %s321 = sshll.u32 [#allocation10], 4
      %s322 = int_to_ptr.vmem [resolvable:$true] %s321
      %327 = dma.vmem_to_hbm [thread:$0]  %s322, 128, %s6, [#allocation4], 64, 64, 4
    $region45: #{tpu_custom_call.1} parent=1 // pred_fallthru
      _
    // Predicated region
    $region46: #{tpu_custom_call.1} parent=1 // pred_check
      _
    $region47: #{tpu_custom_call.1} parent=1 // pred_check_branch
      %329 = sbr.rel (0) target = $region49
    $region48: #{tpu_custom_call.1} parent=1 // pred_region
      %330 = dma.done [#allocation4], 128
    $region49: #{tpu_custom_call.1} parent=1 // pred_fallthru
      _
    %331 = vsyncpa [#allocation3], 1
    %332 = vsyncpa [#allocation6], 1
    %333 = vsyncpa [#allocation9], 1
    %334 = vsyncpa [#allocation4], 1

</llo_original>
